<compile_context>
chip_gen: v6e
topology: v6e:2x2x1
jax: 0.10.0
libtpu: 0.0.40
codegen_flags: <defaults>
</compile_context>

<pallas_src>
import jax
import jax.numpy as jnp
from jax.experimental import pallas as pl
from jax.experimental.pallas import tpu as pltpu


def _round_up(x, m):
    return ((x + m - 1) // m) * m


def _pick_tile_b(batch):
    """Batch rows per grid step: 128-row granules, <=1024 rows, >=2 steps when the
    batch allows (v7x has 2 TensorCores), chosen so the tile divides the 128-padded
    batch (minimal batch padding)."""
    k = _round_up(max(batch, 1), 128) // 128          # number of 128-row chunks
    for g in (8, 4, 2, 1):                            # 1024, 512, 256, 128 rows
        if g <= max(k // 2, 1) and k % g == 0:
            return 128 * g
    return 128


def _make_mlp_kernel(num_hidden):
    """Fused kernel: num_hidden x (matmul + bias + ReLU) + transposed output projection."""

    def kernel(*refs):
        # refs = (x, w0, b0, w1, b1, ..., w_out_row, b_out, o)
        x_ref = refs[0]
        o_ref = refs[-1]
        params = refs[1:-1]

        h = x_ref[...]                                  # (tile_b, input_size) bf16
        for i in range(num_hidden):
            w = params[2 * i][...]                      # (in_i, hid_pad) bf16
            b = params[2 * i + 1][...]                  # (1, hid_pad) f32
            h = jnp.dot(h.astype(jnp.bfloat16), w,
                        preferred_element_type=jnp.float32)
            # nn.Dropout in eval mode == identity, then ReLU (f32 elementwise, v5e-safe).
            h = jnp.maximum(h + b, 0.0)

        w_out = params[-2][...]                         # (1, hid_pad) bf16
        b_out = params[-1][...]                         # (1, 1) f32
        # Final projection computed transposed: contract over hid -> (1, tile_b).
        # Batch on the lane axis keeps the store lane-dense (unmasked vst).
        s = jax.lax.dot_general(
            w_out, h.astype(jnp.bfloat16),
            dimension_numbers=(((1,), (1,)), ((), ())),
            preferred_element_type=jnp.float32)         # (1, tile_b)
        o_ref[0] = s + b_out

    return kernel


def mlp_forward(x, hidden_weights, hidden_biases, w_out, b_out):
    """x: (B, input_size) f32. hidden_weights[i]: (in_i, hidden) pre-transposed.
    Returns (B, 1) f32."""
    num_hidden = len(hidden_weights)
    B, input_size = x.shape
    hidden_dim = hidden_weights[0].shape[1]

    # 256-aligned K/N fills the v6e/v7x 2x256^2 MXU when the real dim is large;
    # 128 for small dims avoids 4x padded FLOPs (and matches v5e's 128x128 MXU).
    align = 256 if hidden_dim >= 256 else 128
    hid_pad = _round_up(hidden_dim, align)

    tile_b = _pick_tile_b(B)
    b_pad = _round_up(B, tile_b)
    num_tiles = b_pad // tile_b

    # x streamed as bf16; batch-padded only (no feature-lane padding round trip).
    if b_pad == B:
        x_p = x.astype(jnp.bfloat16)
    else:
        x_p = jnp.zeros((b_pad, input_size), jnp.bfloat16).at[:B].set(
            x.astype(jnp.bfloat16))

    args = [x_p]
    resident_shapes = []

    in_dim = input_size
    for w, b in zip(hidden_weights, hidden_biases):
        # Zero-padded columns/rows keep results exact: padded bias lanes are zero so
        # ReLU(0+0)=0 keeps padded hidden lanes zero; padded weight rows are zero.
        w_p = jnp.zeros((in_dim, hid_pad), jnp.bfloat16).at[
            :w.shape[0], :w.shape[1]].set(w.astype(jnp.bfloat16))
        b_p = jnp.zeros((1, hid_pad), jnp.float32).at[
            :, :hidden_dim].set(b.reshape(1, -1).astype(jnp.float32))
        args += [w_p, b_p]
        resident_shapes += [(in_dim, hid_pad), (1, hid_pad)]
        in_dim = hid_pad

    w_out_p = jnp.zeros((1, hid_pad), jnp.bfloat16).at[
        :, :hidden_dim].set(w_out.reshape(1, -1).astype(jnp.bfloat16))
    b_out_p = b_out.reshape(1, 1).astype(jnp.float32)
    args += [w_out_p, b_out_p]
    resident_shapes += [(1, hid_pad), (1, 1)]

    kernel = _make_mlp_kernel(num_hidden)

    flops = 2 * b_pad * (input_size * hid_pad
                         + (num_hidden - 1) * hid_pad * hid_pad
                         + hid_pad)
    param_bytes = sum(int(a.size) * a.dtype.itemsize for a in args[1:])
    bytes_accessed = int(x_p.size) * 2 + param_bytes + b_pad * 4
    cost = pl.CostEstimate(flops=flops, transcendentals=0,
                           bytes_accessed=bytes_accessed)

    # VMEM budget: resident params (worst-case double-buffered) + double-buffered
    # x/out tiles + activation scratch. Floor 32 MiB, cap 64 MiB (v7x physical VMEM).
    stream_bytes = 2 * (tile_b * input_size * 2 + tile_b * 4)
    act_bytes = 3 * tile_b * max(hid_pad, input_size) * 4
    vmem_need = 2 * param_bytes + stream_bytes + act_bytes
    vmem_limit_bytes = int(min(max(vmem_need + (8 << 20), 32 << 20), 64 << 20))

    compiler_params = pltpu.CompilerParams(
        dimension_semantics=("parallel",),
        vmem_limit_bytes=vmem_limit_bytes)

    out_shape = jax.ShapeDtypeStruct((num_tiles, 1, tile_b), jnp.float32)
    out_specs = pl.BlockSpec((1, 1, tile_b), lambda i: (i, 0, 0))

    def resident_spec(shape, single_buffer):
        if single_buffer:
            # Constant index_map -> fetched once; single buffering halves its VMEM
            # reservation (matters most under v7x's 64 MiB VMEM).
            return pl.BlockSpec(shape, lambda i: (0, 0),
                                pipeline_mode=pl.Buffered(1))
        return pl.BlockSpec(shape, lambda i: (0, 0))

    def run(single_buffer):
        in_specs = [pl.BlockSpec((tile_b, input_size), lambda i: (i, 0))]
        in_specs += [resident_spec(s, single_buffer) for s in resident_shapes]
        return pl.pallas_call(
            kernel,
            out_shape=out_shape,
            grid=(num_tiles,),
            in_specs=in_specs,
            out_specs=out_specs,
            compiler_params=compiler_params,
            cost_estimate=cost,
        )(*args)

    try:
        out = run(single_buffer=True)
    except Exception:
        # Fallback for Pallas builds that reject Buffered(1) at the pallas_call level.
        out = run(single_buffer=False)

    # (num_tiles, 1, tile_b) -> flat batch order -> (B, 1)
    return out.reshape(-1)[:B].reshape(B, 1)


def init_mlp_params(key, input_size, num_hidden, hidden_dim):
    """PyTorch-style nn.Linear init: U(-1/sqrt(fan_in), 1/sqrt(fan_in)). Weights stored (in, out)."""
    hidden_weights, hidden_biases = [], []
    in_dim = input_size
    for _ in range(num_hidden):
        key, kw, kb = jax.random.split(key, 3)
        bound = 1.0 / jnp.sqrt(in_dim)
        hidden_weights.append(
            jax.random.uniform(kw, (in_dim, hidden_dim), jnp.float32, -bound, bound))
        hidden_biases.append(
            jax.random.uniform(kb, (hidden_dim,), jnp.float32, -bound, bound))
        in_dim = hidden_dim
    key, kw, kb = jax.random.split(key, 3)
    bound = 1.0 / jnp.sqrt(hidden_dim)
    w_out = jax.random.uniform(kw, (hidden_dim, 1), jnp.float32, -bound, bound)
    b_out = jax.random.uniform(kb, (1,), jnp.float32, -bound, bound)
    return hidden_weights, hidden_biases, w_out, b_out


def mlp_reference_f32(x, hidden_weights, hidden_biases, w_out, b_out):
    h = x
    for w, b in zip(hidden_weights, hidden_biases):
        h = jnp.maximum(h @ w + b, 0.0)
    return h @ w_out + b_out


def mlp_reference_bf16(x, hidden_weights, hidden_biases, w_out, b_out):
    # Matches the kernel's numerics: bf16 dot operands, f32 accumulation/elementwise.
    h = x.astype(jnp.float32)
    for w, b in zip(hidden_weights, hidden_biases):
        h = jnp.maximum(
            jnp.dot(h.astype(jnp.bfloat16), w.astype(jnp.bfloat16),
                    preferred_element_type=jnp.float32) + b, 0.0)
    return jnp.dot(h.astype(jnp.bfloat16), w_out.astype(jnp.bfloat16),
                   preferred_element_type=jnp.float32) + b_out


if __name__ == "__main__":
    # Shapes consistent with the module: MLP(input_size=32, num_hidden=2,
    # hidden_dim=32, dropout=0.1), batch=8.
    input_size, num_hidden, hidden_dim = 32, 2, 32
    batch = 8

    key = jax.random.PRNGKey(0)
    key, kx = jax.random.split(key)
    x = jax.random.normal(kx, (batch, input_size), jnp.float32)

    hidden_weights, hidden_biases, w_out, b_out = init_mlp_params(
        key, input_size, num_hidden, hidden_dim)

    out = mlp_forward(x, hidden_weights, hidden_biases, w_out, b_out)
    out = jax.block_until_ready(out)
    assert out.shape == (batch, 1), out.shape

    ref_bf16 = mlp_reference_bf16(x, hidden_weights, hidden_biases, w_out, b_out)
    ref_f32 = mlp_reference_f32(x, hidden_weights, hidden_biases, w_out, b_out)
    assert jnp.allclose(out, ref_bf16, atol=1e-3, rtol=1e-3), (out, ref_bf16)
    assert jnp.allclose(out, ref_f32, atol=5e-2, rtol=5e-2), (out, ref_f32)

    print("KERNEL_OK")
</pallas_src>

<mosaic_0001>
module attributes {stable_mosaic.version = 11 : i64} {
  func.func @kernel(%arg0: i32, %arg1: memref<128x32xbf16, #tpu.memory_space<vmem>>, %arg2: memref<32x128xbf16, #tpu.memory_space<vmem>>, %arg3: memref<1x128xf32, #tpu.memory_space<vmem>>, %arg4: memref<128x128xbf16, #tpu.memory_space<vmem>>, %arg5: memref<1x128xf32, #tpu.memory_space<vmem>>, %arg6: memref<1x128xbf16, #tpu.memory_space<vmem>>, %arg7: memref<1x1xf32, #tpu.memory_space<vmem>>, %arg8: memref<1x1x128xf32, #tpu.memory_space<vmem>>) attributes {dimension_semantics = [#tpu.dimension_semantics<parallel>], iteration_bounds = array<i64: 1>, scalar_prefetch = 0 : i64, scratch_operands = 0 : i64, tpu.core_type = #tpu.core_type<tc>, window_params = [{transform_indices = @transform_0, window_bounds = array<i64: 128, 32>}, {pipeline_mode = #tpu.pipeline_mode<synchronous>, transform_indices = @transform_1, window_bounds = array<i64: 32, 128>}, {pipeline_mode = #tpu.pipeline_mode<synchronous>, transform_indices = @transform_2, window_bounds = array<i64: 1, 128>}, {pipeline_mode = #tpu.pipeline_mode<synchronous>, transform_indices = @transform_3, window_bounds = array<i64: 128, 128>}, {pipeline_mode = #tpu.pipeline_mode<synchronous>, transform_indices = @transform_4, window_bounds = array<i64: 1, 128>}, {pipeline_mode = #tpu.pipeline_mode<synchronous>, transform_indices = @transform_5, window_bounds = array<i64: 1, 128>}, {pipeline_mode = #tpu.pipeline_mode<synchronous>, transform_indices = @transform_6, window_bounds = array<i64: 1, 1>}, {transform_indices = @transform_7, window_bounds = array<i64: 1, 1, 128>}]} {
    %c0 = arith.constant 0 : index
    %c0_0 = arith.constant 0 : index
    %0 = vector.load %arg1[%c0, %c0_0] : memref<128x32xbf16, #tpu.memory_space<vmem>>, vector<128x32xbf16>
    %c0_1 = arith.constant 0 : index
    %c0_2 = arith.constant 0 : index
    %1 = vector.load %arg2[%c0_1, %c0_2] : memref<32x128xbf16, #tpu.memory_space<vmem>>, vector<32x128xbf16>
    %c0_3 = arith.constant 0 : index
    %c0_4 = arith.constant 0 : index
    %2 = vector.load %arg3[%c0_3, %c0_4] : memref<1x128xf32, #tpu.memory_space<vmem>>, vector<1x128xf32>
    %cst = arith.constant dense<0.000000e+00> : vector<128x128xf32>
    %3 = tpu.matmul %0, %1, %cst {dimension_numbers = #tpu.dot_dimension_numbers<[1], [0], [0], [1], [0, 0, 1, 1], [], []>} : vector<128x32xbf16>, vector<32x128xbf16>, vector<128x128xf32> -> vector<128x128xf32>
    %4 = vector.broadcast %2 : vector<1x128xf32> to vector<128x128xf32>
    %5 = arith.addf %3, %4 : vector<128x128xf32>
    %cst_5 = arith.constant 0.000000e+00 : f32
    %6 = vector.broadcast %cst_5 : f32 to vector<128x128xf32>
    %7 = arith.maximumf %5, %6 : vector<128x128xf32>
    %c0_6 = arith.constant 0 : index
    %c0_7 = arith.constant 0 : index
    %8 = vector.load %arg4[%c0_6, %c0_7] : memref<128x128xbf16, #tpu.memory_space<vmem>>, vector<128x128xbf16>
    %c0_8 = arith.constant 0 : index
    %c0_9 = arith.constant 0 : index
    %9 = vector.load %arg5[%c0_8, %c0_9] : memref<1x128xf32, #tpu.memory_space<vmem>>, vector<1x128xf32>
    %10 = arith.truncf %7 : vector<128x128xf32> to vector<128x128xbf16>
    %cst_10 = arith.constant dense<0.000000e+00> : vector<128x128xf32>
    %11 = tpu.matmul %10, %8, %cst_10 {dimension_numbers = #tpu.dot_dimension_numbers<[1], [0], [0], [1], [0, 0, 1, 1], [], []>} : vector<128x128xbf16>, vector<128x128xbf16>, vector<128x128xf32> -> vector<128x128xf32>
    %12 = vector.broadcast %9 : vector<1x128xf32> to vector<128x128xf32>
    %13 = arith.addf %11, %12 : vector<128x128xf32>
    %cst_11 = arith.constant 0.000000e+00 : f32
    %14 = vector.broadcast %cst_11 : f32 to vector<128x128xf32>
    %15 = arith.maximumf %13, %14 : vector<128x128xf32>
    %c0_12 = arith.constant 0 : index
    %c0_13 = arith.constant 0 : index
    %16 = vector.load %arg6[%c0_12, %c0_13] : memref<1x128xbf16, #tpu.memory_space<vmem>>, vector<1x128xbf16>
    %c0_14 = arith.constant 0 : index
    %c0_15 = arith.constant 0 : index
    %17 = vector.load %arg7[%c0_14, %c0_15] : memref<1x1xf32, #tpu.memory_space<vmem>>, vector<1x1xf32>
    %18 = arith.truncf %15 : vector<128x128xf32> to vector<128x128xbf16>
    %cst_16 = arith.constant dense<0.000000e+00> : vector<1x128xf32>
    %19 = tpu.matmul %16, %18, %cst_16 {dimension_numbers = #tpu.dot_dimension_numbers<[1], [1], [0], [0], [0, 0, 1, 0], [], []>} : vector<1x128xbf16>, vector<128x128xbf16>, vector<1x128xf32> -> vector<1x128xf32>
    %20 = vector.broadcast %17 : vector<1x1xf32> to vector<1x128xf32>
    %21 = arith.addf %19, %20 : vector<1x128xf32>
    %c0_17 = arith.constant 0 : index
    %c0_18 = arith.constant 0 : index
    %c0_19 = arith.constant 0 : index
    %22 = vector.load %arg8[%c0_17, %c0_18, %c0_19] : memref<1x1x128xf32, #tpu.memory_space<vmem>>, vector<1x1x128xf32>
    %23 = vector.shape_cast %22 : vector<1x1x128xf32> to vector<1x128xf32>
    %24 = vector.shape_cast %21 : vector<1x128xf32> to vector<1x1x128xf32>
    tpu.vector_store %arg8[%c0_17, %c0_18, %c0_19], %24 {strides = array<i32>} : memref<1x1x128xf32, #tpu.memory_space<vmem>>, vector<1x1x128xf32>,
    return
  }
  func.func @transform_0(%arg0: i32) -> (i32, i32) {
    %c0_i32 = arith.constant 0 : i32
    %c0_i32_0 = arith.constant 0 : i32
    return %arg0, %c0_i32 : i32, i32
  }
  func.func @transform_1(%arg0: i32) -> (i32, i32) {
    %c0_i32 = arith.constant 0 : i32
    %c0_i32_0 = arith.constant 0 : i32
    %c0_i32_1 = arith.constant 0 : i32
    return %c0_i32, %c0_i32_0 : i32, i32
  }
  func.func @transform_2(%arg0: i32) -> (i32, i32) {
    %c0_i32 = arith.constant 0 : i32
    %c0_i32_0 = arith.constant 0 : i32
    %c0_i32_1 = arith.constant 0 : i32
    return %c0_i32, %c0_i32_0 : i32, i32
  }
  func.func @transform_3(%arg0: i32) -> (i32, i32) {
    %c0_i32 = arith.constant 0 : i32
    %c0_i32_0 = arith.constant 0 : i32
    %c0_i32_1 = arith.constant 0 : i32
    return %c0_i32, %c0_i32_0 : i32, i32
  }
  func.func @transform_4(%arg0: i32) -> (i32, i32) {
    %c0_i32 = arith.constant 0 : i32
    %c0_i32_0 = arith.constant 0 : i32
    %c0_i32_1 = arith.constant 0 : i32
    return %c0_i32, %c0_i32_0 : i32, i32
  }
  func.func @transform_5(%arg0: i32) -> (i32, i32) {
    %c0_i32 = arith.constant 0 : i32
    %c0_i32_0 = arith.constant 0 : i32
    %c0_i32_1 = arith.constant 0 : i32
    return %c0_i32, %c0_i32_0 : i32, i32
  }
  func.func @transform_6(%arg0: i32) -> (i32, i32) {
    %c0_i32 = arith.constant 0 : i32
    %c0_i32_0 = arith.constant 0 : i32
    %c0_i32_1 = arith.constant 0 : i32
    return %c0_i32, %c0_i32_0 : i32, i32
  }
  func.func @transform_7(%arg0: i32) -> (i32, i32, i32) {
    %c0_i32 = arith.constant 0 : i32
    %c0_i32_0 = arith.constant 0 : i32
    %c0_i32_1 = arith.constant 0 : i32
    return %arg0, %c0_i32, %c0_i32_0 : i32, i32, i32
  }
}

module attributes {stable_mosaic.version = 11 : i64} {
  func.func @kernel(%arg0: i32, %arg1: memref<128x32xbf16, #tpu.memory_space<vmem>>, %arg2: memref<32x128xbf16, #tpu.memory_space<vmem>>, %arg3: memref<1x128xf32, #tpu.memory_space<vmem>>, %arg4: memref<128x128xbf16, #tpu.memory_space<vmem>>, %arg5: memref<1x128xf32, #tpu.memory_space<vmem>>, %arg6: memref<1x128xbf16, #tpu.memory_space<vmem>>, %arg7: memref<1x1xf32, #tpu.memory_space<vmem>>, %arg8: memref<1x1x128xf32, #tpu.memory_space<vmem>>) attributes {dimension_semantics = [#tpu.dimension_semantics<parallel>], iteration_bounds = array<i64: 1>, scalar_prefetch = 0 : i64, scratch_operands = 0 : i64, tpu.core_type = #tpu.core_type<tc>, window_params = [{transform_indices = @transform_0, window_bounds = array<i64: 128, 32>}, {pipeline_mode = #tpu.pipeline_mode<synchronous>, transform_indices = @transform_1, window_bounds = array<i64: 32, 128>}, {pipeline_mode = #tpu.pipeline_mode<synchronous>, transform_indices = @transform_2, window_bounds = array<i64: 1, 128>}, {pipeline_mode = #tpu.pipeline_mode<synchronous>, transform_indices = @transform_3, window_bounds = array<i64: 128, 128>}, {pipeline_mode = #tpu.pipeline_mode<synchronous>, transform_indices = @transform_4, window_bounds = array<i64: 1, 128>}, {pipeline_mode = #tpu.pipeline_mode<synchronous>, transform_indices = @transform_5, window_bounds = array<i64: 1, 128>}, {pipeline_mode = #tpu.pipeline_mode<synchronous>, transform_indices = @transform_6, window_bounds = array<i64: 1, 1>}, {transform_indices = @transform_7, window_bounds = array<i64: 1, 1, 128>}]} {
    %c0 = arith.constant 0 : index
    %c0_0 = arith.constant 0 : index
    %0 = vector.load %arg1[%c0, %c0_0] : memref<128x32xbf16, #tpu.memory_space<vmem>>, vector<128x32xbf16>
    %c0_1 = arith.constant 0 : index
    %c0_2 = arith.constant 0 : index
    %1 = vector.load %arg2[%c0_1, %c0_2] : memref<32x128xbf16, #tpu.memory_space<vmem>>, vector<32x128xbf16>
    %c0_3 = arith.constant 0 : index
    %c0_4 = arith.constant 0 : index
    %2 = vector.load %arg3[%c0_3, %c0_4] : memref<1x128xf32, #tpu.memory_space<vmem>>, vector<1x128xf32>
    %cst = arith.constant dense<0.000000e+00> : vector<128x128xf32>
    %3 = tpu.matmul %0, %1, %cst {dimension_numbers = #tpu.dot_dimension_numbers<[1], [0], [0], [1], [0, 0, 1, 1], [], []>} : vector<128x32xbf16>, vector<32x128xbf16>, vector<128x128xf32> -> vector<128x128xf32>
    %4 = vector.broadcast %2 : vector<1x128xf32> to vector<128x128xf32>
    %5 = arith.addf %3, %4 : vector<128x128xf32>
    %cst_5 = arith.constant 0.000000e+00 : f32
    %6 = vector.broadcast %cst_5 : f32 to vector<128x128xf32>
    %7 = arith.maximumf %5, %6 : vector<128x128xf32>
    %c0_6 = arith.constant 0 : index
    %c0_7 = arith.constant 0 : index
    %8 = vector.load %arg4[%c0_6, %c0_7] : memref<128x128xbf16, #tpu.memory_space<vmem>>, vector<128x128xbf16>
    %c0_8 = arith.constant 0 : index
    %c0_9 = arith.constant 0 : index
    %9 = vector.load %arg5[%c0_8, %c0_9] : memref<1x128xf32, #tpu.memory_space<vmem>>, vector<1x128xf32>
    %10 = arith.truncf %7 : vector<128x128xf32> to vector<128x128xbf16>
    %cst_10 = arith.constant dense<0.000000e+00> : vector<128x128xf32>
    %11 = tpu.matmul %10, %8, %cst_10 {dimension_numbers = #tpu.dot_dimension_numbers<[1], [0], [0], [1], [0, 0, 1, 1], [], []>} : vector<128x128xbf16>, vector<128x128xbf16>, vector<128x128xf32> -> vector<128x128xf32>
    %12 = vector.broadcast %9 : vector<1x128xf32> to vector<128x128xf32>
    %13 = arith.addf %11, %12 : vector<128x128xf32>
    %cst_11 = arith.constant 0.000000e+00 : f32
    %14 = vector.broadcast %cst_11 : f32 to vector<128x128xf32>
    %15 = arith.maximumf %13, %14 : vector<128x128xf32>
    %c0_12 = arith.constant 0 : index
    %c0_13 = arith.constant 0 : index
    %16 = vector.load %arg6[%c0_12, %c0_13] : memref<1x128xbf16, #tpu.memory_space<vmem>>, vector<1x128xbf16>
    %c0_14 = arith.constant 0 : index
    %c0_15 = arith.constant 0 : index
    %17 = vector.load %arg7[%c0_14, %c0_15] : memref<1x1xf32, #tpu.memory_space<vmem>>, vector<1x1xf32>
    %18 = arith.truncf %15 : vector<128x128xf32> to vector<128x128xbf16>
    %cst_16 = arith.constant dense<0.000000e+00> : vector<1x128xf32>
    %19 = tpu.matmul %16, %18, %cst_16 {dimension_numbers = #tpu.dot_dimension_numbers<[1], [1], [0], [0], [0, 0, 1, 0], [], []>} : vector<1x128xbf16>, vector<128x128xbf16>, vector<1x128xf32> -> vector<1x128xf32>
    %20 = vector.broadcast %17 : vector<1x1xf32> to vector<1x128xf32>
    %21 = arith.addf %19, %20 : vector<1x128xf32>
    %c0_17 = arith.constant 0 : index
    %c0_18 = arith.constant 0 : index
    %c0_19 = arith.constant 0 : index
    %22 = vector.load %arg8[%c0_17, %c0_18, %c0_19] : memref<1x1x128xf32, #tpu.memory_space<vmem>>, vector<1x1x128xf32>
    %23 = vector.shape_cast %22 : vector<1x1x128xf32> to vector<1x128xf32>
    %24 = vector.shape_cast %21 : vector<1x128xf32> to vector<1x1x128xf32>
    tpu.vector_store %arg8[%c0_17, %c0_18, %c0_19], %24 {strides = array<i32>} : memref<1x1x128xf32, #tpu.memory_space<vmem>>, vector<1x1x128xf32>,
    return
  }
  func.func @transform_0(%arg0: i32) -> (i32, i32) {
    %c0_i32 = arith.constant 0 : i32
    %c0_i32_0 = arith.constant 0 : i32
    return %arg0, %c0_i32 : i32, i32
  }
  func.func @transform_1(%arg0: i32) -> (i32, i32) {
    %c0_i32 = arith.constant 0 : i32
    %c0_i32_0 = arith.constant 0 : i32
    %c0_i32_1 = arith.constant 0 : i32
    return %c0_i32, %c0_i32_0 : i32, i32
  }
  func.func @transform_2(%arg0: i32) -> (i32, i32) {
    %c0_i32 = arith.constant 0 : i32
    %c0_i32_0 = arith.constant 0 : i32
    %c0_i32_1 = arith.constant 0 : i32
    return %c0_i32, %c0_i32_0 : i32, i32
  }
  func.func @transform_3(%arg0: i32) -> (i32, i32) {
    %c0_i32 = arith.constant 0 : i32
    %c0_i32_0 = arith.constant 0 : i32
    %c0_i32_1 = arith.constant 0 : i32
    return %c0_i32, %c0_i32_0 : i32, i32
  }
  func.func @transform_4(%arg0: i32) -> (i32, i32) {
    %c0_i32 = arith.constant 0 : i32
    %c0_i32_0 = arith.constant 0 : i32
    %c0_i32_1 = arith.constant 0 : i32
    return %c0_i32, %c0_i32_0 : i32, i32
  }
  func.func @transform_5(%arg0: i32) -> (i32, i32) {
    %c0_i32 = arith.constant 0 : i32
    %c0_i32_0 = arith.constant 0 : i32
    %c0_i32_1 = arith.constant 0 : i32
    return %c0_i32, %c0_i32_0 : i32, i32
  }
  func.func @transform_6(%arg0: i32) -> (i32, i32) {
    %c0_i32 = arith.constant 0 : i32
    %c0_i32_0 = arith.constant 0 : i32
    %c0_i32_1 = arith.constant 0 : i32
    return %c0_i32, %c0_i32_0 : i32, i32
  }
  func.func @transform_7(%arg0: i32) -> (i32, i32, i32) {
    %c0_i32 = arith.constant 0 : i32
    %c0_i32_0 = arith.constant 0 : i32
    %c0_i32_1 = arith.constant 0 : i32
    return %arg0, %c0_i32, %c0_i32_0 : i32, i32, i32
  }
}

</mosaic_0001>

<llo_original>
// kernel: tpu_custom_call.1
$region0: #{tpu_custom_call.1}
  #allocation0 [shape = 'u32[]', space=smem, size = 0x4, offset = 0x4, fixed_abs, tag = 'smem constant byte address 0x4 - core index']
  #allocation1 [shape = 'u32[144,128]{1,0:T(1,128)}', space=vmem, size = 0x12000, scoped, tag = 'internal scratch']
  #allocation2 [shape = 'f32[1,1]{1,0:T(1,128)S(1)}', space=vmem, size = 0x200, scoped, tag = 'scoped memory for tpu_custom_call.1']
  %s0 = inlined_call_operand.vmem [shape: bf16[128,32], index: 0, kind: input, shape index: {}]
  %s1 = inlined_call_operand.vmem [shape: bf16[32,128], index: 1, kind: input, shape index: {}]
  %s2 = inlined_call_operand.vmem [shape: f32[1,128], index: 2, kind: input, shape index: {}]
  %s3 = inlined_call_operand.vmem [shape: bf16[128,128], index: 3, kind: input, shape index: {}]
  %s4 = inlined_call_operand.vmem [shape: f32[1,128], index: 4, kind: input, shape index: {}]
  %s5 = inlined_call_operand.vmem [shape: bf16[1,128], index: 5, kind: input, shape index: {}]
  %s6 = inlined_call_operand.<no memory space> [shape: f32[1,1], index: 6, kind: input, shape index: {}]
  %s7 = inlined_call_operand.hbm [shape: f32[1,1,128], index: 7, kind: output, shape index: {}]
  %s8 = sld [smem:[#allocation0]]
  $region38: #{tpu_custom_call.1} parent=0
    _
  %s10 = ssub.s32 1, %s8
  %s11 = scalar_select 0, %s10, %s8
  %v12 = vstv %s6
  %13 = vst [vmem:[#allocation2] sm:$0x1] %v12
  $region1: #{tpu_custom_call.1} parent=0
    #allocation3 [shape = 'u8[512]{0}', space=vmem, size = 0x400, scoped, tag = 'output window, operand 0, single buffered']
    #allocation4 [shape = 's32[1]{0}', space=sflag, size = 0x4, scoped, tag = 'scoped memory for tpu_custom_call.1']
    %14 = vsyncpa [#allocation4], 0
    // Predicated region
    $region2: #{tpu_custom_call.1} parent=1 // pred_check
      _
    $region3: #{tpu_custom_call.1} parent=1 // pred_check_branch
      %16 = sbr.rel (0) target = $region5
    $region4: #{tpu_custom_call.1} parent=1 // pred_region
      _
    $region5: #{tpu_custom_call.1} parent=1 // pred_fallthru
      _
    // Predicated region
    $region6: #{tpu_custom_call.1} parent=1 // pred_check
      _
    $region7: #{tpu_custom_call.1} parent=1 // pred_check_branch
      %18 = sbr.rel (0) target = $region9
    $region8: #{tpu_custom_call.1} parent=1 // pred_region
      _
    $region9: #{tpu_custom_call.1} parent=1 // pred_fallthru
      _
    // Predicated region
    $region10: #{tpu_custom_call.1} parent=1 // pred_check
      _
    $region11: #{tpu_custom_call.1} parent=1 // pred_check_branch
      %20 = sbr.rel (0) target = $region13
    $region12: #{tpu_custom_call.1} parent=1 // pred_region
      _
    $region13: #{tpu_custom_call.1} parent=1 // pred_fallthru
      _
    // Predicated region
    $region14: #{tpu_custom_call.1} parent=1 // pred_check
      _
    $region15: #{tpu_custom_call.1} parent=1 // pred_check_branch
      %22 = sbr.rel (0) target = $region17
    $region16: #{tpu_custom_call.1} parent=1 // pred_region
      _
    $region17: #{tpu_custom_call.1} parent=1 // pred_fallthru
      _
    // Predicated region
    $region18: #{tpu_custom_call.1} parent=1 // pred_check
      _
    $region19: #{tpu_custom_call.1} parent=1 // pred_check_branch
      %24 = sbr.rel (0) target = $region21
    $region20: #{tpu_custom_call.1} parent=1 // pred_region
      _
    $region21: #{tpu_custom_call.1} parent=1 // pred_fallthru
      _
    // Predicated region
    $region22: #{tpu_custom_call.1} parent=1 // pred_check
      _
    $region23: #{tpu_custom_call.1} parent=1 // pred_check_branch
      %26 = sbr.rel (0) target = $region25
    $region24: #{tpu_custom_call.1} parent=1 // pred_region
      _
    $region25: #{tpu_custom_call.1} parent=1 // pred_fallthru
      _
    // Predicated region
    $region26: #{tpu_custom_call.1} parent=1 // pred_check
      _
    $region27: #{tpu_custom_call.1} parent=1 // pred_check_branch
      %28 = sbr.rel (0) target = $region29
    $region28: #{tpu_custom_call.1} parent=1 // pred_region
      _
    $region29: #{tpu_custom_call.1} parent=1 // pred_fallthru
      _
    %v30 = vld [vmem:[%s0] sm:$0xf]
    %v31 = vld [vmem:[%s0 + $0x4] sm:$0xf]
    %v32 = vld [vmem:[%s0 + $0x8] sm:$0xf]
    %v33 = vld [vmem:[%s0 + $0xc] sm:$0xf]
    %v34 = vld [vmem:[%s0 + $0x10] sm:$0xf]
    %v35 = vld [vmem:[%s0 + $0x14] sm:$0xf]
    %v36 = vld [vmem:[%s0 + $0x18] sm:$0xf]
    %v37 = vld [vmem:[%s0 + $0x1c] sm:$0xf]
    %v38 = vld [vmem:[%s0 + $0x20] sm:$0xf]
    %v39 = vld [vmem:[%s0 + $0x24] sm:$0xf]
    %v40 = vld [vmem:[%s0 + $0x28] sm:$0xf]
    %v41 = vld [vmem:[%s0 + $0x2c] sm:$0xf]
    %v42 = vld [vmem:[%s0 + $0x30] sm:$0xf]
    %v43 = vld [vmem:[%s0 + $0x34] sm:$0xf]
    %v44 = vld [vmem:[%s0 + $0x38] sm:$0xf]
    %v45 = vld [vmem:[%s0 + $0x3c] sm:$0xf]
    %v46 = vld [vmem:[%s1] sm:$0xf]
    %v47 = vld [vmem:[%s1 + $0x4] sm:$0xf]
    %v48 = vld [vmem:[%s1 + $0x8] sm:$0xf]
    %v49 = vld [vmem:[%s1 + $0xc] sm:$0xf]
    %v50 = vld [vmem:[%s2] sm:$0x1]
    %v52 = vlaneseq
    %v53 = vshrl.u32 %v52, 7
    %v54 = vsub.s32 0, %v53
    %v55 = vrot.slane %v50, %v54
    %v73 = vunpack.c.l.b16 %v30
    %v74 = vunpack.c.l.b16 %v31
    %v75 = vunpack.c.l.b16 %v32
    %v76 = vunpack.c.l.b16 %v33
    %v77 = vunpack.c.l.b16 %v34
    %v78 = vunpack.c.l.b16 %v35
    %v79 = vunpack.c.l.b16 %v36
    %v80 = vunpack.c.l.b16 %v37
    %v81 = vunpack.c.l.b16 %v38
    %v82 = vunpack.c.l.b16 %v39
    %v83 = vunpack.c.l.b16 %v40
    %v84 = vunpack.c.l.b16 %v41
    %v85 = vunpack.c.l.b16 %v42
    %v86 = vunpack.c.l.b16 %v43
    %v87 = vunpack.c.l.b16 %v44
    %v88 = vunpack.c.l.b16 %v45
    %v89 = vpack.c.b16 %v74, %v73
    %v90 = vpack.c.b16 %v76, %v75
    %v91 = vpack.c.b16 %v78, %v77
    %v92 = vpack.c.b16 %v80, %v79
    %v93 = vpack.c.b16 %v82, %v81
    %v94 = vpack.c.b16 %v84, %v83
    %v95 = vpack.c.b16 %v86, %v85
    %v96 = vpack.c.b16 %v88, %v87
    %v101 = vunpack.c.l.b16 %v46
    %v102 = vunpack.c.l.b16 %v47
    %v103 = vunpack.c.l.b16 %v48
    %v104 = vunpack.c.l.b16 %v49
    %v105 = vpack.c.b16 %v102, %v101
    %v106 = vpack.c.b16 %v104, %v103
    %vm109 = vcmask 261120
    %v111 = vsel %vm109, %v89, 0
    %v114 = vsel %vm109, %v90, 0
    %v117 = vsel %vm109, %v91, 0
    %v120 = vsel %vm109, %v92, 0
    %v123 = vsel %vm109, %v93, 0
    %v126 = vsel %vm109, %v94, 0
    %v129 = vsel %vm109, %v95, 0
    %v132 = vsel %vm109, %v96, 0
    %134 = vmatprep.subr.bf16.mxu0 0
    %135 = vmatpush1.bf16.msra.mxu0 0
    %136 = vmatprep.subr.bf16.mxu0 0
    %137 = vmatpush1.bf16.msra.mxu0 0
    %138 = vmatprep.subr.bf16.mxu0 0
    %139 = vmatpush1.bf16.msra.mxu0 0
    %140 = vmatprep.subr.bf16.mxu0 0
    %141 = vmatpush1.bf16.msra.mxu0 0
    %142 = vmatprep.subr.bf16.mxu0 0
    %143 = vmatpush1.bf16.msra.mxu0 0
    %144 = vmatprep.subr.bf16.mxu0 0
    %145 = vmatpush1.bf16.msra.mxu0 0
    %146 = vmatprep.subr.bf16.mxu0 0
    %147 = vmatpush1.bf16.msra.mxu0 %v106
    %148 = vmatprep.subr.bf16.mxu0 0
    %149 = vmatpush1.bf16.msra.mxu0 %v105
    %150 = vmatprep.subr.bf16.mxu0 0
    %151 = vmatpush2.bf16.msra.mxu0 0
    %152 = vmatprep.subr.bf16.mxu0 0
    %153 = vmatpush2.bf16.msra.mxu0 0
    %154 = vmatprep.subr.bf16.mxu0 0
    %155 = vmatpush2.bf16.msra.mxu0 0
    %156 = vmatprep.subr.bf16.mxu0 0
    %157 = vmatpush2.bf16.msra.mxu0 0
    %158 = vmatprep.subr.bf16.mxu0 0
    %159 = vmatpush2.bf16.msra.mxu0 0
    %160 = vmatprep.subr.bf16.mxu0 0
    %161 = vmatpush2.bf16.msra.mxu0 0
    %162 = vmatprep.subr.bf16.mxu0 0
    %163 = vmatpush2.bf16.msra.mxu0 0
    %164 = vmatprep.subr.bf16.mxu0 0
    %165 = vmatpush2.bf16.msra.mxu0 0
    %166 = vmatprep.mubr.bf16.mxu0 0
    %167 = vmatmul.mubr.bf16.gmra.mxu0 %v111
    %v168 = vpop.f32.mrf.mxu0
    %v169 = vadd.f32 %v55, %v168
    %v170 = vpop.f32.mrf.mxu0
    %v171 = vpop.f32.mrf.mxu0
    %v172 = vadd.f32 %v55, %v171
    %v173 = vpop.f32.mrf.mxu0
    %174 = vmatprep.mubr.bf16.mxu0 0
    %175 = vmatmul.mubr.bf16.gmra.mxu0 %v114
    %v176 = vpop.f32.mrf.mxu0
    %v177 = vadd.f32 %v55, %v176
    %v178 = vpop.f32.mrf.mxu0
    %v179 = vpop.f32.mrf.mxu0
    %v180 = vadd.f32 %v55, %v179
    %v181 = vpop.f32.mrf.mxu0
    %182 = vmatprep.mubr.bf16.mxu0 0
    %183 = vmatmul.mubr.bf16.gmra.mxu0 %v117
    %v184 = vpop.f32.mrf.mxu0
    %v185 = vadd.f32 %v55, %v184
    %v186 = vpop.f32.mrf.mxu0
    %v187 = vpop.f32.mrf.mxu0
    %v188 = vadd.f32 %v55, %v187
    %v189 = vpop.f32.mrf.mxu0
    %190 = vmatprep.mubr.bf16.mxu0 0
    %191 = vmatmul.mubr.bf16.gmra.mxu0 %v120
    %v192 = vpop.f32.mrf.mxu0
    %v193 = vadd.f32 %v55, %v192
    %v194 = vpop.f32.mrf.mxu0
    %v195 = vpop.f32.mrf.mxu0
    %v196 = vadd.f32 %v55, %v195
    %v197 = vpop.f32.mrf.mxu0
    %198 = vmatprep.mubr.bf16.mxu0 0
    %199 = vmatmul.mubr.bf16.gmra.mxu0 %v123
    %v200 = vpop.f32.mrf.mxu0
    %v201 = vadd.f32 %v55, %v200
    %v202 = vpop.f32.mrf.mxu0
    %v203 = vpop.f32.mrf.mxu0
    %v204 = vadd.f32 %v55, %v203
    %v205 = vpop.f32.mrf.mxu0
    %206 = vmatprep.mubr.bf16.mxu0 0
    %207 = vmatmul.mubr.bf16.gmra.mxu0 %v126
    %v208 = vpop.f32.mrf.mxu0
    %v209 = vadd.f32 %v55, %v208
    %v210 = vpop.f32.mrf.mxu0
    %v211 = vpop.f32.mrf.mxu0
    %v212 = vadd.f32 %v55, %v211
    %v213 = vpop.f32.mrf.mxu0
    %214 = vmatprep.mubr.bf16.mxu0 0
    %215 = vmatmul.mubr.bf16.gmra.mxu0 %v129
    %v216 = vpop.f32.mrf.mxu0
    %v217 = vadd.f32 %v55, %v216
    %v218 = vpop.f32.mrf.mxu0
    %v219 = vpop.f32.mrf.mxu0
    %v220 = vadd.f32 %v55, %v219
    %v221 = vpop.f32.mrf.mxu0
    %222 = vmatprep.mubr.bf16.mxu0 0
    %223 = vmatmul.mubr.bf16.gmra.mxu0 %v132
    %v224 = vpop.f32.mrf.mxu0
    %v225 = vadd.f32 %v55, %v224
    %v226 = vpop.f32.mrf.mxu0
    %v227 = vpop.f32.mrf.mxu0
    %v228 = vadd.f32 %v55, %v227
    %v229 = vpop.f32.mrf.mxu0
    %230 = vdwg.mxu0
    %v231 = vmax.f32 %v169, 0.0
    %v232 = vmax.f32 %v172, 0.0
    %v233 = vmax.f32 %v177, 0.0
    %v234 = vmax.f32 %v180, 0.0
    %v235 = vmax.f32 %v185, 0.0
    %v236 = vmax.f32 %v188, 0.0
    %v237 = vmax.f32 %v193, 0.0
    %v238 = vmax.f32 %v196, 0.0
    %v239 = vmax.f32 %v201, 0.0
    %v240 = vmax.f32 %v204, 0.0
    %v241 = vmax.f32 %v209, 0.0
    %v242 = vmax.f32 %v212, 0.0
    %v243 = vmax.f32 %v217, 0.0
    %v244 = vmax.f32 %v220, 0.0
    %v245 = vmax.f32 %v225, 0.0
    %v246 = vmax.f32 %v228, 0.0
    %v247 = vld [vmem:[%s3] sm:$0xf]
    %v248 = vld [vmem:[%s3 + $0x4] sm:$0xf]
    %v249 = vld [vmem:[%s3 + $0x8] sm:$0xf]
    %v250 = vld [vmem:[%s3 + $0xc] sm:$0xf]
    %v251 = vld [vmem:[%s3 + $0x10] sm:$0xf]
    %v252 = vld [vmem:[%s3 + $0x14] sm:$0xf]
    %v253 = vld [vmem:[%s3 + $0x18] sm:$0xf]
    %v254 = vld [vmem:[%s3 + $0x1c] sm:$0xf]
    %v255 = vld [vmem:[%s3 + $0x20] sm:$0xf]
    %v256 = vld [vmem:[%s3 + $0x24] sm:$0xf]
    %v257 = vld [vmem:[%s3 + $0x28] sm:$0xf]
    %v258 = vld [vmem:[%s3 + $0x2c] sm:$0xf]
    %v259 = vld [vmem:[%s3 + $0x30] sm:$0xf]
    %v260 = vld [vmem:[%s3 + $0x34] sm:$0xf]
    %v261 = vld [vmem:[%s3 + $0x38] sm:$0xf]
    %v262 = vld [vmem:[%s3 + $0x3c] sm:$0xf]
    %v263 = vld [vmem:[%s4] sm:$0x1]
    %v264 = vpack.c.bf16 %v232, %v231
    %v265 = vpack.c.bf16 %v234, %v233
    %v266 = vpack.c.bf16 %v236, %v235
    %v267 = vpack.c.bf16 %v238, %v237
    %v268 = vpack.c.bf16 %v240, %v239
    %v269 = vpack.c.bf16 %v242, %v241
    %v270 = vpack.c.bf16 %v244, %v243
    %v271 = vpack.c.bf16 %v246, %v245
    %v273 = vlaneseq
    %v274 = vshrl.u32 %v273, 7
    %v275 = vsub.s32 0, %v274
    %v276 = vrot.slane %v263, %v275
    %v294 = vunpack.c.l.b16 %v247
    %v295 = vunpack.c.l.b16 %v248
    %v296 = vunpack.c.l.b16 %v249
    %v297 = vunpack.c.l.b16 %v250
    %v298 = vunpack.c.l.b16 %v251
    %v299 = vunpack.c.l.b16 %v252
    %v300 = vunpack.c.l.b16 %v253
    %v301 = vunpack.c.l.b16 %v254
    %v302 = vunpack.c.l.b16 %v255
    %v303 = vunpack.c.l.b16 %v256
    %v304 = vunpack.c.l.b16 %v257
    %v305 = vunpack.c.l.b16 %v258
    %v306 = vunpack.c.l.b16 %v259
    %v307 = vunpack.c.l.b16 %v260
    %v308 = vunpack.c.l.b16 %v261
    %v309 = vunpack.c.l.b16 %v262
    %v310 = vpack.c.b16 %v295, %v294
    %v311 = vpack.c.b16 %v297, %v296
    %v312 = vpack.c.b16 %v299, %v298
    %v313 = vpack.c.b16 %v301, %v300
    %v314 = vpack.c.b16 %v303, %v302
    %v315 = vpack.c.b16 %v305, %v304
    %v316 = vpack.c.b16 %v307, %v306
    %v317 = vpack.c.b16 %v309, %v308
    %326 = vmatprep.subr.bf16.mxu0 0
    %327 = vmatpush1.bf16.msra.mxu0 %v317
    %328 = vmatprep.subr.bf16.mxu0 0
    %329 = vmatpush1.bf16.msra.mxu0 %v316
    %330 = vmatprep.subr.bf16.mxu0 0
    %331 = vmatpush1.bf16.msra.mxu0 %v315
    %332 = vmatprep.subr.bf16.mxu0 0
    %333 = vmatpush1.bf16.msra.mxu0 %v314
    %334 = vmatprep.subr.bf16.mxu0 0
    %335 = vmatpush1.bf16.msra.mxu0 %v313
    %336 = vmatprep.subr.bf16.mxu0 0
    %337 = vmatpush1.bf16.msra.mxu0 %v312
    %338 = vmatprep.subr.bf16.mxu0 0
    %339 = vmatpush1.bf16.msra.mxu0 %v311
    %340 = vmatprep.subr.bf16.mxu0 0
    %341 = vmatpush1.bf16.msra.mxu0 %v310
    %342 = vmatprep.subr.bf16.mxu0 0
    %343 = vmatpush2.bf16.msra.mxu0 0
    %344 = vmatprep.subr.bf16.mxu0 0
    %345 = vmatpush2.bf16.msra.mxu0 0
    %346 = vmatprep.subr.bf16.mxu0 0
    %347 = vmatpush2.bf16.msra.mxu0 0
    %348 = vmatprep.subr.bf16.mxu0 0
    %349 = vmatpush2.bf16.msra.mxu0 0
    %350 = vmatprep.subr.bf16.mxu0 0
    %351 = vmatpush2.bf16.msra.mxu0 0
    %352 = vmatprep.subr.bf16.mxu0 0
    %353 = vmatpush2.bf16.msra.mxu0 0
    %354 = vmatprep.subr.bf16.mxu0 0
    %355 = vmatpush2.bf16.msra.mxu0 0
    %356 = vmatprep.subr.bf16.mxu0 0
    %357 = vmatpush2.bf16.msra.mxu0 0
    %358 = vmatprep.mubr.bf16.mxu0 0
    %359 = vmatmul.mubr.bf16.gmra.mxu0 %v264
    %v360 = vpop.f32.mrf.mxu0
    %v361 = vadd.f32 %v276, %v360
    %v362 = vpop.f32.mrf.mxu0
    %v363 = vpop.f32.mrf.mxu0
    %v364 = vadd.f32 %v276, %v363
    %v365 = vpop.f32.mrf.mxu0
    %366 = vmatprep.mubr.bf16.mxu0 0
    %367 = vmatmul.mubr.bf16.gmra.mxu0 %v265
    %v368 = vpop.f32.mrf.mxu0
    %v369 = vadd.f32 %v276, %v368
    %v370 = vpop.f32.mrf.mxu0
    %v371 = vpop.f32.mrf.mxu0
    %v372 = vadd.f32 %v276, %v371
    %v373 = vpop.f32.mrf.mxu0
    %374 = vmatprep.mubr.bf16.mxu0 0
    %375 = vmatmul.mubr.bf16.gmra.mxu0 %v266
    %v376 = vpop.f32.mrf.mxu0
    %v377 = vadd.f32 %v276, %v376
    %v378 = vpop.f32.mrf.mxu0
    %v379 = vpop.f32.mrf.mxu0
    %v380 = vadd.f32 %v276, %v379
    %v381 = vpop.f32.mrf.mxu0
    %382 = vmatprep.mubr.bf16.mxu0 0
    %383 = vmatmul.mubr.bf16.gmra.mxu0 %v267
    %v384 = vpop.f32.mrf.mxu0
    %v385 = vadd.f32 %v276, %v384
    %v386 = vpop.f32.mrf.mxu0
    %v387 = vpop.f32.mrf.mxu0
    %v388 = vadd.f32 %v276, %v387
    %v389 = vpop.f32.mrf.mxu0
    %390 = vmatprep.mubr.bf16.mxu0 0
    %391 = vmatmul.mubr.bf16.gmra.mxu0 %v268
    %v392 = vpop.f32.mrf.mxu0
    %v393 = vadd.f32 %v276, %v392
    %v394 = vpop.f32.mrf.mxu0
    %v395 = vpop.f32.mrf.mxu0
    %v396 = vadd.f32 %v276, %v395
    %v397 = vpop.f32.mrf.mxu0
    %398 = vmatprep.mubr.bf16.mxu0 0
    %399 = vmatmul.mubr.bf16.gmra.mxu0 %v269
    %v400 = vpop.f32.mrf.mxu0
    %v401 = vadd.f32 %v276, %v400
    %v402 = vpop.f32.mrf.mxu0
    %v403 = vpop.f32.mrf.mxu0
    %v404 = vadd.f32 %v276, %v403
    %v405 = vpop.f32.mrf.mxu0
    %406 = vmatprep.mubr.bf16.mxu0 0
    %407 = vmatmul.mubr.bf16.gmra.mxu0 %v270
    %v408 = vpop.f32.mrf.mxu0
    %v409 = vadd.f32 %v276, %v408
    %v410 = vpop.f32.mrf.mxu0
    %v411 = vpop.f32.mrf.mxu0
    %v412 = vadd.f32 %v276, %v411
    %v413 = vpop.f32.mrf.mxu0
    %414 = vmatprep.mubr.bf16.mxu0 0
    %415 = vmatmul.mubr.bf16.gmra.mxu0 %v271
    %v416 = vpop.f32.mrf.mxu0
    %v417 = vadd.f32 %v276, %v416
    %v418 = vpop.f32.mrf.mxu0
    %v419 = vpop.f32.mrf.mxu0
    %v420 = vadd.f32 %v276, %v419
    %v421 = vpop.f32.mrf.mxu0
    %422 = vdwg.mxu0
    %v423 = vmax.f32 %v361, 0.0
    %v424 = vmax.f32 %v364, 0.0
    %v425 = vmax.f32 %v369, 0.0
    %v426 = vmax.f32 %v372, 0.0
    %v427 = vmax.f32 %v377, 0.0
    %v428 = vmax.f32 %v380, 0.0
    %v429 = vmax.f32 %v385, 0.0
    %v430 = vmax.f32 %v388, 0.0
    %v431 = vmax.f32 %v393, 0.0
    %v432 = vmax.f32 %v396, 0.0
    %v433 = vmax.f32 %v401, 0.0
    %v434 = vmax.f32 %v404, 0.0
    %v435 = vmax.f32 %v409, 0.0
    %v436 = vmax.f32 %v412, 0.0
    %v437 = vmax.f32 %v417, 0.0
    %v438 = vmax.f32 %v420, 0.0
    %v439 = vld [vmem:[%s5] sm:$0x1]
    %v440 = vld [vmem:[#allocation2] sm:$0x1]
    %v441 = vpack.c.bf16 %v424, %v423
    %v442 = vpack.c.bf16 %v426, %v425
    %v443 = vpack.c.bf16 %v428, %v427
    %v444 = vpack.c.bf16 %v430, %v429
    %v445 = vpack.c.bf16 %v432, %v431
    %v446 = vpack.c.bf16 %v434, %v433
    %v447 = vpack.c.bf16 %v436, %v435
    %v448 = vpack.c.bf16 %v438, %v437
    %450 = vset.pattern.permute.xlu0 0
    %451 = vperm.xlu0 %450, %v440
    %v452 = vpop.permute.xlu0 %451
    %v454 = vlaneseq
    %v455 = vshrl.u32 %v454, 7
    %v456 = vsub.s32 0, %v455
    %v457 = vrot.slane %v452, %v456
    %458 = vmatprep.subr.bf16.mxu0 0
    %459 = vmatpush1.bf16.xpose.msra.mxu0 %v448
    %460 = vmatprep.subr.bf16.mxu0 0
    %461 = vmatpush1.bf16.xpose.msra.mxu0 %v447
    %462 = vmatprep.subr.bf16.mxu0 0
    %463 = vmatpush1.bf16.xpose.msra.mxu0 %v446
    %464 = vmatprep.subr.bf16.mxu0 0
    %465 = vmatpush1.bf16.xpose.msra.mxu0 %v445
    %466 = vmatprep.subr.bf16.mxu0 0
    %467 = vmatpush1.bf16.xpose.msra.mxu0 %v444
    %468 = vmatprep.subr.bf16.mxu0 0
    %469 = vmatpush1.bf16.xpose.msra.mxu0 %v443
    %470 = vmatprep.subr.bf16.mxu0 0
    %471 = vmatpush1.bf16.xpose.msra.mxu0 %v442
    %472 = vmatprep.subr.bf16.mxu0 0
    %473 = vmatpush1.bf16.xpose.msra.mxu0 %v441
    %474 = vmatprep.subr.bf16.mxu0 0
    %475 = vmatpush2.bf16.xpose.msra.mxu0 0
    %476 = vmatprep.subr.bf16.mxu0 0
    %477 = vmatpush2.bf16.xpose.msra.mxu0 0
    %478 = vmatprep.subr.bf16.mxu0 0
    %479 = vmatpush2.bf16.xpose.msra.mxu0 0
    %480 = vmatprep.subr.bf16.mxu0 0
    %481 = vmatpush2.bf16.xpose.msra.mxu0 0
    %482 = vmatprep.subr.bf16.mxu0 0
    %483 = vmatpush2.bf16.xpose.msra.mxu0 0
    %484 = vmatprep.subr.bf16.mxu0 0
    %485 = vmatpush2.bf16.xpose.msra.mxu0 0
    %486 = vmatprep.subr.bf16.mxu0 0
    %487 = vmatpush2.bf16.xpose.msra.mxu0 0
    %488 = vmatprep.subr.bf16.mxu0 0
    %489 = vmatpush2.bf16.xpose.msra.mxu0 0
    %490 = vmatprep.mubr.bf16.mxu0 0
    %491 = vmatmul.mubr.bf16.gmra.mxu0 %v439
    %v492 = vpop.f32.mrf.mxu0
    %v493 = vadd.f32 %v457, %v492
    %v494 = vpop.f32.mrf.mxu0
    %v495 = vpop.f32.mrf.mxu0
    %v496 = vpop.f32.mrf.mxu0
    %497 = vdwg.mxu0
    %498 = vst [vmem:[#allocation3] sm:$0x1] %v493
    // Predicated region
    $region30: #{tpu_custom_call.1} parent=1 // pred_check
      _
    $region31: #{tpu_custom_call.1} parent=1 // pred_check_branch
      %500 = sbr.rel (0) target = $region33
    $region32: #{tpu_custom_call.1} parent=1 // pred_region
      %s502 = ssub.s32 16, 16
      %503 = vsyncadd [#allocation4], %s502
      %s505 = sshll.u32 [#allocation3], 4
      %s506 = int_to_ptr.vmem [resolvable:$true] %s505
      %508 = dma.vmem_to_hbm [thread:$0]  %s506, 16, %s7, [#allocation4]
    $region33: #{tpu_custom_call.1} parent=1 // pred_fallthru
      _
    // Predicated region
    $region34: #{tpu_custom_call.1} parent=1 // pred_check
      _
    $region35: #{tpu_custom_call.1} parent=1 // pred_check_branch
      %510 = sbr.rel (0) target = $region37
    $region36: #{tpu_custom_call.1} parent=1 // pred_region
      %511 = dma.done [#allocation4], 16
    $region37: #{tpu_custom_call.1} parent=1 // pred_fallthru
      _
    %512 = vsyncpa [#allocation4], 1

// kernel: tpu_custom_call.1
$region0: #{tpu_custom_call.1}
  #allocation0 [shape = 'u32[]', space=smem, size = 0x4, offset = 0x4, fixed_abs, tag = 'smem constant byte address 0x4 - core index']
  #allocation1 [shape = 'u32[144,128]{1,0:T(1,128)}', space=vmem, size = 0x12000, scoped, tag = 'internal scratch']
  #allocation2 [shape = 'f32[1,1]{1,0:T(1,128)S(1)}', space=vmem, size = 0x200, scoped, tag = 'scoped memory for tpu_custom_call.1']
  %s0 = inlined_call_operand.vmem [shape: bf16[128,32], index: 0, kind: input, shape index: {}]
  %s1 = inlined_call_operand.vmem [shape: bf16[32,128], index: 1, kind: input, shape index: {}]
  %s2 = inlined_call_operand.vmem [shape: f32[1,128], index: 2, kind: input, shape index: {}]
  %s3 = inlined_call_operand.vmem [shape: bf16[128,128], index: 3, kind: input, shape index: {}]
  %s4 = inlined_call_operand.vmem [shape: f32[1,128], index: 4, kind: input, shape index: {}]
  %s5 = inlined_call_operand.vmem [shape: bf16[1,128], index: 5, kind: input, shape index: {}]
  %s6 = inlined_call_operand.<no memory space> [shape: f32[1,1], index: 6, kind: input, shape index: {}]
  %s7 = inlined_call_operand.hbm [shape: f32[1,1,128], index: 7, kind: output, shape index: {}]
  %s8 = sld [smem:[#allocation0]]
  $region38: #{tpu_custom_call.1} parent=0
    _
  %s10 = ssub.s32 1, %s8
  %s11 = scalar_select 0, %s10, %s8
  %v12 = vstv %s6
  %13 = vst [vmem:[#allocation2] sm:$0x1] %v12
  $region1: #{tpu_custom_call.1} parent=0
    #allocation3 [shape = 'u8[512]{0}', space=vmem, size = 0x400, scoped, tag = 'output window, operand 0, single buffered']
    #allocation4 [shape = 's32[1]{0}', space=sflag, size = 0x4, scoped, tag = 'scoped memory for tpu_custom_call.1']
    %14 = vsyncpa [#allocation4], 0
    // Predicated region
    $region2: #{tpu_custom_call.1} parent=1 // pred_check
      _
    $region3: #{tpu_custom_call.1} parent=1 // pred_check_branch
      %16 = sbr.rel (0) target = $region5
    $region4: #{tpu_custom_call.1} parent=1 // pred_region
      _
    $region5: #{tpu_custom_call.1} parent=1 // pred_fallthru
      _
    // Predicated region
    $region6: #{tpu_custom_call.1} parent=1 // pred_check
      _
    $region7: #{tpu_custom_call.1} parent=1 // pred_check_branch
      %18 = sbr.rel (0) target = $region9
    $region8: #{tpu_custom_call.1} parent=1 // pred_region
      _
    $region9: #{tpu_custom_call.1} parent=1 // pred_fallthru
      _
    // Predicated region
    $region10: #{tpu_custom_call.1} parent=1 // pred_check
      _
    $region11: #{tpu_custom_call.1} parent=1 // pred_check_branch
      %20 = sbr.rel (0) target = $region13
    $region12: #{tpu_custom_call.1} parent=1 // pred_region
      _
    $region13: #{tpu_custom_call.1} parent=1 // pred_fallthru
      _
    // Predicated region
    $region14: #{tpu_custom_call.1} parent=1 // pred_check
      _
    $region15: #{tpu_custom_call.1} parent=1 // pred_check_branch
      %22 = sbr.rel (0) target = $region17
    $region16: #{tpu_custom_call.1} parent=1 // pred_region
      _
    $region17: #{tpu_custom_call.1} parent=1 // pred_fallthru
      _
    // Predicated region
    $region18: #{tpu_custom_call.1} parent=1 // pred_check
      _
    $region19: #{tpu_custom_call.1} parent=1 // pred_check_branch
      %24 = sbr.rel (0) target = $region21
    $region20: #{tpu_custom_call.1} parent=1 // pred_region
      _
    $region21: #{tpu_custom_call.1} parent=1 // pred_fallthru
      _
    // Predicated region
    $region22: #{tpu_custom_call.1} parent=1 // pred_check
      _
    $region23: #{tpu_custom_call.1} parent=1 // pred_check_branch
      %26 = sbr.rel (0) target = $region25
    $region24: #{tpu_custom_call.1} parent=1 // pred_region
      _
    $region25: #{tpu_custom_call.1} parent=1 // pred_fallthru
      _
    // Predicated region
    $region26: #{tpu_custom_call.1} parent=1 // pred_check
      _
    $region27: #{tpu_custom_call.1} parent=1 // pred_check_branch
      %28 = sbr.rel (0) target = $region29
    $region28: #{tpu_custom_call.1} parent=1 // pred_region
      _
    $region29: #{tpu_custom_call.1} parent=1 // pred_fallthru
      _
    %v30 = vld [vmem:[%s0] sm:$0xf]
    %v31 = vld [vmem:[%s0 + $0x4] sm:$0xf]
    %v32 = vld [vmem:[%s0 + $0x8] sm:$0xf]
    %v33 = vld [vmem:[%s0 + $0xc] sm:$0xf]
    %v34 = vld [vmem:[%s0 + $0x10] sm:$0xf]
    %v35 = vld [vmem:[%s0 + $0x14] sm:$0xf]
    %v36 = vld [vmem:[%s0 + $0x18] sm:$0xf]
    %v37 = vld [vmem:[%s0 + $0x1c] sm:$0xf]
    %v38 = vld [vmem:[%s0 + $0x20] sm:$0xf]
    %v39 = vld [vmem:[%s0 + $0x24] sm:$0xf]
    %v40 = vld [vmem:[%s0 + $0x28] sm:$0xf]
    %v41 = vld [vmem:[%s0 + $0x2c] sm:$0xf]
    %v42 = vld [vmem:[%s0 + $0x30] sm:$0xf]
    %v43 = vld [vmem:[%s0 + $0x34] sm:$0xf]
    %v44 = vld [vmem:[%s0 + $0x38] sm:$0xf]
    %v45 = vld [vmem:[%s0 + $0x3c] sm:$0xf]
    %v46 = vld [vmem:[%s1] sm:$0xf]
    %v47 = vld [vmem:[%s1 + $0x4] sm:$0xf]
    %v48 = vld [vmem:[%s1 + $0x8] sm:$0xf]
    %v49 = vld [vmem:[%s1 + $0xc] sm:$0xf]
    %v50 = vld [vmem:[%s2] sm:$0x1]
    %v52 = vlaneseq
    %v53 = vshrl.u32 %v52, 7
    %v54 = vsub.s32 0, %v53
    %v55 = vrot.slane %v50, %v54
    %v73 = vunpack.c.l.b16 %v30
    %v74 = vunpack.c.l.b16 %v31
    %v75 = vunpack.c.l.b16 %v32
    %v76 = vunpack.c.l.b16 %v33
    %v77 = vunpack.c.l.b16 %v34
    %v78 = vunpack.c.l.b16 %v35
    %v79 = vunpack.c.l.b16 %v36
    %v80 = vunpack.c.l.b16 %v37
    %v81 = vunpack.c.l.b16 %v38
    %v82 = vunpack.c.l.b16 %v39
    %v83 = vunpack.c.l.b16 %v40
    %v84 = vunpack.c.l.b16 %v41
    %v85 = vunpack.c.l.b16 %v42
    %v86 = vunpack.c.l.b16 %v43
    %v87 = vunpack.c.l.b16 %v44
    %v88 = vunpack.c.l.b16 %v45
    %v89 = vpack.c.b16 %v74, %v73
    %v90 = vpack.c.b16 %v76, %v75
    %v91 = vpack.c.b16 %v78, %v77
    %v92 = vpack.c.b16 %v80, %v79
    %v93 = vpack.c.b16 %v82, %v81
    %v94 = vpack.c.b16 %v84, %v83
    %v95 = vpack.c.b16 %v86, %v85
    %v96 = vpack.c.b16 %v88, %v87
    %v101 = vunpack.c.l.b16 %v46
    %v102 = vunpack.c.l.b16 %v47
    %v103 = vunpack.c.l.b16 %v48
    %v104 = vunpack.c.l.b16 %v49
    %v105 = vpack.c.b16 %v102, %v101
    %v106 = vpack.c.b16 %v104, %v103
    %vm109 = vcmask 261120
    %v111 = vsel %vm109, %v89, 0
    %v114 = vsel %vm109, %v90, 0
    %v117 = vsel %vm109, %v91, 0
    %v120 = vsel %vm109, %v92, 0
    %v123 = vsel %vm109, %v93, 0
    %v126 = vsel %vm109, %v94, 0
    %v129 = vsel %vm109, %v95, 0
    %v132 = vsel %vm109, %v96, 0
    %134 = vmatprep.subr.bf16.mxu0 0
    %135 = vmatpush1.bf16.msra.mxu0 0
    %136 = vmatprep.subr.bf16.mxu0 0
    %137 = vmatpush1.bf16.msra.mxu0 0
    %138 = vmatprep.subr.bf16.mxu0 0
    %139 = vmatpush1.bf16.msra.mxu0 0
    %140 = vmatprep.subr.bf16.mxu0 0
    %141 = vmatpush1.bf16.msra.mxu0 0
    %142 = vmatprep.subr.bf16.mxu0 0
    %143 = vmatpush1.bf16.msra.mxu0 0
    %144 = vmatprep.subr.bf16.mxu0 0
    %145 = vmatpush1.bf16.msra.mxu0 0
    %146 = vmatprep.subr.bf16.mxu0 0
    %147 = vmatpush1.bf16.msra.mxu0 %v106
    %148 = vmatprep.subr.bf16.mxu0 0
    %149 = vmatpush1.bf16.msra.mxu0 %v105
    %150 = vmatprep.subr.bf16.mxu0 0
    %151 = vmatpush2.bf16.msra.mxu0 0
    %152 = vmatprep.subr.bf16.mxu0 0
    %153 = vmatpush2.bf16.msra.mxu0 0
    %154 = vmatprep.subr.bf16.mxu0 0
    %155 = vmatpush2.bf16.msra.mxu0 0
    %156 = vmatprep.subr.bf16.mxu0 0
    %157 = vmatpush2.bf16.msra.mxu0 0
    %158 = vmatprep.subr.bf16.mxu0 0
    %159 = vmatpush2.bf16.msra.mxu0 0
    %160 = vmatprep.subr.bf16.mxu0 0
    %161 = vmatpush2.bf16.msra.mxu0 0
    %162 = vmatprep.subr.bf16.mxu0 0
    %163 = vmatpush2.bf16.msra.mxu0 0
    %164 = vmatprep.subr.bf16.mxu0 0
    %165 = vmatpush2.bf16.msra.mxu0 0
    %166 = vmatprep.mubr.bf16.mxu0 0
    %167 = vmatmul.mubr.bf16.gmra.mxu0 %v111
    %v168 = vpop.f32.mrf.mxu0
    %v169 = vadd.f32 %v55, %v168
    %v170 = vpop.f32.mrf.mxu0
    %v171 = vpop.f32.mrf.mxu0
    %v172 = vadd.f32 %v55, %v171
    %v173 = vpop.f32.mrf.mxu0
    %174 = vmatprep.mubr.bf16.mxu0 0
    %175 = vmatmul.mubr.bf16.gmra.mxu0 %v114
    %v176 = vpop.f32.mrf.mxu0
    %v177 = vadd.f32 %v55, %v176
    %v178 = vpop.f32.mrf.mxu0
    %v179 = vpop.f32.mrf.mxu0
    %v180 = vadd.f32 %v55, %v179
    %v181 = vpop.f32.mrf.mxu0
    %182 = vmatprep.mubr.bf16.mxu0 0
    %183 = vmatmul.mubr.bf16.gmra.mxu0 %v117
    %v184 = vpop.f32.mrf.mxu0
    %v185 = vadd.f32 %v55, %v184
    %v186 = vpop.f32.mrf.mxu0
    %v187 = vpop.f32.mrf.mxu0
    %v188 = vadd.f32 %v55, %v187
    %v189 = vpop.f32.mrf.mxu0
    %190 = vmatprep.mubr.bf16.mxu0 0
    %191 = vmatmul.mubr.bf16.gmra.mxu0 %v120
    %v192 = vpop.f32.mrf.mxu0
    %v193 = vadd.f32 %v55, %v192
    %v194 = vpop.f32.mrf.mxu0
    %v195 = vpop.f32.mrf.mxu0
    %v196 = vadd.f32 %v55, %v195
    %v197 = vpop.f32.mrf.mxu0
    %198 = vmatprep.mubr.bf16.mxu0 0
    %199 = vmatmul.mubr.bf16.gmra.mxu0 %v123
    %v200 = vpop.f32.mrf.mxu0
    %v201 = vadd.f32 %v55, %v200
    %v202 = vpop.f32.mrf.mxu0
    %v203 = vpop.f32.mrf.mxu0
    %v204 = vadd.f32 %v55, %v203
    %v205 = vpop.f32.mrf.mxu0
    %206 = vmatprep.mubr.bf16.mxu0 0
    %207 = vmatmul.mubr.bf16.gmra.mxu0 %v126
    %v208 = vpop.f32.mrf.mxu0
    %v209 = vadd.f32 %v55, %v208
    %v210 = vpop.f32.mrf.mxu0
    %v211 = vpop.f32.mrf.mxu0
    %v212 = vadd.f32 %v55, %v211
    %v213 = vpop.f32.mrf.mxu0
    %214 = vmatprep.mubr.bf16.mxu0 0
    %215 = vmatmul.mubr.bf16.gmra.mxu0 %v129
    %v216 = vpop.f32.mrf.mxu0
    %v217 = vadd.f32 %v55, %v216
    %v218 = vpop.f32.mrf.mxu0
    %v219 = vpop.f32.mrf.mxu0
    %v220 = vadd.f32 %v55, %v219
    %v221 = vpop.f32.mrf.mxu0
    %222 = vmatprep.mubr.bf16.mxu0 0
    %223 = vmatmul.mubr.bf16.gmra.mxu0 %v132
    %v224 = vpop.f32.mrf.mxu0
    %v225 = vadd.f32 %v55, %v224
    %v226 = vpop.f32.mrf.mxu0
    %v227 = vpop.f32.mrf.mxu0
    %v228 = vadd.f32 %v55, %v227
    %v229 = vpop.f32.mrf.mxu0
    %230 = vdwg.mxu0
    %v231 = vmax.f32 %v169, 0.0
    %v232 = vmax.f32 %v172, 0.0
    %v233 = vmax.f32 %v177, 0.0
    %v234 = vmax.f32 %v180, 0.0
    %v235 = vmax.f32 %v185, 0.0
    %v236 = vmax.f32 %v188, 0.0
    %v237 = vmax.f32 %v193, 0.0
    %v238 = vmax.f32 %v196, 0.0
    %v239 = vmax.f32 %v201, 0.0
    %v240 = vmax.f32 %v204, 0.0
    %v241 = vmax.f32 %v209, 0.0
    %v242 = vmax.f32 %v212, 0.0
    %v243 = vmax.f32 %v217, 0.0
    %v244 = vmax.f32 %v220, 0.0
    %v245 = vmax.f32 %v225, 0.0
    %v246 = vmax.f32 %v228, 0.0
    %v247 = vld [vmem:[%s3] sm:$0xf]
    %v248 = vld [vmem:[%s3 + $0x4] sm:$0xf]
    %v249 = vld [vmem:[%s3 + $0x8] sm:$0xf]
    %v250 = vld [vmem:[%s3 + $0xc] sm:$0xf]
    %v251 = vld [vmem:[%s3 + $0x10] sm:$0xf]
    %v252 = vld [vmem:[%s3 + $0x14] sm:$0xf]
    %v253 = vld [vmem:[%s3 + $0x18] sm:$0xf]
    %v254 = vld [vmem:[%s3 + $0x1c] sm:$0xf]
    %v255 = vld [vmem:[%s3 + $0x20] sm:$0xf]
    %v256 = vld [vmem:[%s3 + $0x24] sm:$0xf]
    %v257 = vld [vmem:[%s3 + $0x28] sm:$0xf]
    %v258 = vld [vmem:[%s3 + $0x2c] sm:$0xf]
    %v259 = vld [vmem:[%s3 + $0x30] sm:$0xf]
    %v260 = vld [vmem:[%s3 + $0x34] sm:$0xf]
    %v261 = vld [vmem:[%s3 + $0x38] sm:$0xf]
    %v262 = vld [vmem:[%s3 + $0x3c] sm:$0xf]
    %v263 = vld [vmem:[%s4] sm:$0x1]
    %v264 = vpack.c.bf16 %v232, %v231
    %v265 = vpack.c.bf16 %v234, %v233
    %v266 = vpack.c.bf16 %v236, %v235
    %v267 = vpack.c.bf16 %v238, %v237
    %v268 = vpack.c.bf16 %v240, %v239
    %v269 = vpack.c.bf16 %v242, %v241
    %v270 = vpack.c.bf16 %v244, %v243
    %v271 = vpack.c.bf16 %v246, %v245
    %v273 = vlaneseq
    %v274 = vshrl.u32 %v273, 7
    %v275 = vsub.s32 0, %v274
    %v276 = vrot.slane %v263, %v275
    %v294 = vunpack.c.l.b16 %v247
    %v295 = vunpack.c.l.b16 %v248
    %v296 = vunpack.c.l.b16 %v249
    %v297 = vunpack.c.l.b16 %v250
    %v298 = vunpack.c.l.b16 %v251
    %v299 = vunpack.c.l.b16 %v252
    %v300 = vunpack.c.l.b16 %v253
    %v301 = vunpack.c.l.b16 %v254
    %v302 = vunpack.c.l.b16 %v255
    %v303 = vunpack.c.l.b16 %v256
    %v304 = vunpack.c.l.b16 %v257
    %v305 = vunpack.c.l.b16 %v258
    %v306 = vunpack.c.l.b16 %v259
    %v307 = vunpack.c.l.b16 %v260
    %v308 = vunpack.c.l.b16 %v261
    %v309 = vunpack.c.l.b16 %v262
    %v310 = vpack.c.b16 %v295, %v294
    %v311 = vpack.c.b16 %v297, %v296
    %v312 = vpack.c.b16 %v299, %v298
    %v313 = vpack.c.b16 %v301, %v300
    %v314 = vpack.c.b16 %v303, %v302
    %v315 = vpack.c.b16 %v305, %v304
    %v316 = vpack.c.b16 %v307, %v306
    %v317 = vpack.c.b16 %v309, %v308
    %326 = vmatprep.subr.bf16.mxu0 0
    %327 = vmatpush1.bf16.msra.mxu0 %v317
    %328 = vmatprep.subr.bf16.mxu0 0
    %329 = vmatpush1.bf16.msra.mxu0 %v316
    %330 = vmatprep.subr.bf16.mxu0 0
    %331 = vmatpush1.bf16.msra.mxu0 %v315
    %332 = vmatprep.subr.bf16.mxu0 0
    %333 = vmatpush1.bf16.msra.mxu0 %v314
    %334 = vmatprep.subr.bf16.mxu0 0
    %335 = vmatpush1.bf16.msra.mxu0 %v313
    %336 = vmatprep.subr.bf16.mxu0 0
    %337 = vmatpush1.bf16.msra.mxu0 %v312
    %338 = vmatprep.subr.bf16.mxu0 0
    %339 = vmatpush1.bf16.msra.mxu0 %v311
    %340 = vmatprep.subr.bf16.mxu0 0
    %341 = vmatpush1.bf16.msra.mxu0 %v310
    %342 = vmatprep.subr.bf16.mxu0 0
    %343 = vmatpush2.bf16.msra.mxu0 0
    %344 = vmatprep.subr.bf16.mxu0 0
    %345 = vmatpush2.bf16.msra.mxu0 0
    %346 = vmatprep.subr.bf16.mxu0 0
    %347 = vmatpush2.bf16.msra.mxu0 0
    %348 = vmatprep.subr.bf16.mxu0 0
    %349 = vmatpush2.bf16.msra.mxu0 0
    %350 = vmatprep.subr.bf16.mxu0 0
    %351 = vmatpush2.bf16.msra.mxu0 0
    %352 = vmatprep.subr.bf16.mxu0 0
    %353 = vmatpush2.bf16.msra.mxu0 0
    %354 = vmatprep.subr.bf16.mxu0 0
    %355 = vmatpush2.bf16.msra.mxu0 0
    %356 = vmatprep.subr.bf16.mxu0 0
    %357 = vmatpush2.bf16.msra.mxu0 0
    %358 = vmatprep.mubr.bf16.mxu0 0
    %359 = vmatmul.mubr.bf16.gmra.mxu0 %v264
    %v360 = vpop.f32.mrf.mxu0
    %v361 = vadd.f32 %v276, %v360
    %v362 = vpop.f32.mrf.mxu0
    %v363 = vpop.f32.mrf.mxu0
    %v364 = vadd.f32 %v276, %v363
    %v365 = vpop.f32.mrf.mxu0
    %366 = vmatprep.mubr.bf16.mxu0 0
    %367 = vmatmul.mubr.bf16.gmra.mxu0 %v265
    %v368 = vpop.f32.mrf.mxu0
    %v369 = vadd.f32 %v276, %v368
    %v370 = vpop.f32.mrf.mxu0
    %v371 = vpop.f32.mrf.mxu0
    %v372 = vadd.f32 %v276, %v371
    %v373 = vpop.f32.mrf.mxu0
    %374 = vmatprep.mubr.bf16.mxu0 0
    %375 = vmatmul.mubr.bf16.gmra.mxu0 %v266
    %v376 = vpop.f32.mrf.mxu0
    %v377 = vadd.f32 %v276, %v376
    %v378 = vpop.f32.mrf.mxu0
    %v379 = vpop.f32.mrf.mxu0
    %v380 = vadd.f32 %v276, %v379
    %v381 = vpop.f32.mrf.mxu0
    %382 = vmatprep.mubr.bf16.mxu0 0
    %383 = vmatmul.mubr.bf16.gmra.mxu0 %v267
    %v384 = vpop.f32.mrf.mxu0
    %v385 = vadd.f32 %v276, %v384
    %v386 = vpop.f32.mrf.mxu0
    %v387 = vpop.f32.mrf.mxu0
    %v388 = vadd.f32 %v276, %v387
    %v389 = vpop.f32.mrf.mxu0
    %390 = vmatprep.mubr.bf16.mxu0 0
    %391 = vmatmul.mubr.bf16.gmra.mxu0 %v268
    %v392 = vpop.f32.mrf.mxu0
    %v393 = vadd.f32 %v276, %v392
    %v394 = vpop.f32.mrf.mxu0
    %v395 = vpop.f32.mrf.mxu0
    %v396 = vadd.f32 %v276, %v395
    %v397 = vpop.f32.mrf.mxu0
    %398 = vmatprep.mubr.bf16.mxu0 0
    %399 = vmatmul.mubr.bf16.gmra.mxu0 %v269
    %v400 = vpop.f32.mrf.mxu0
    %v401 = vadd.f32 %v276, %v400
    %v402 = vpop.f32.mrf.mxu0
    %v403 = vpop.f32.mrf.mxu0
    %v404 = vadd.f32 %v276, %v403
    %v405 = vpop.f32.mrf.mxu0
    %406 = vmatprep.mubr.bf16.mxu0 0
    %407 = vmatmul.mubr.bf16.gmra.mxu0 %v270
    %v408 = vpop.f32.mrf.mxu0
    %v409 = vadd.f32 %v276, %v408
    %v410 = vpop.f32.mrf.mxu0
    %v411 = vpop.f32.mrf.mxu0
    %v412 = vadd.f32 %v276, %v411
    %v413 = vpop.f32.mrf.mxu0
    %414 = vmatprep.mubr.bf16.mxu0 0
    %415 = vmatmul.mubr.bf16.gmra.mxu0 %v271
    %v416 = vpop.f32.mrf.mxu0
    %v417 = vadd.f32 %v276, %v416
    %v418 = vpop.f32.mrf.mxu0
    %v419 = vpop.f32.mrf.mxu0
    %v420 = vadd.f32 %v276, %v419
    %v421 = vpop.f32.mrf.mxu0
    %422 = vdwg.mxu0
    %v423 = vmax.f32 %v361, 0.0
    %v424 = vmax.f32 %v364, 0.0
    %v425 = vmax.f32 %v369, 0.0
    %v426 = vmax.f32 %v372, 0.0
    %v427 = vmax.f32 %v377, 0.0
    %v428 = vmax.f32 %v380, 0.0
    %v429 = vmax.f32 %v385, 0.0
    %v430 = vmax.f32 %v388, 0.0
    %v431 = vmax.f32 %v393, 0.0
    %v432 = vmax.f32 %v396, 0.0
    %v433 = vmax.f32 %v401, 0.0
    %v434 = vmax.f32 %v404, 0.0
    %v435 = vmax.f32 %v409, 0.0
    %v436 = vmax.f32 %v412, 0.0
    %v437 = vmax.f32 %v417, 0.0
    %v438 = vmax.f32 %v420, 0.0
    %v439 = vld [vmem:[%s5] sm:$0x1]
    %v440 = vld [vmem:[#allocation2] sm:$0x1]
    %v441 = vpack.c.bf16 %v424, %v423
    %v442 = vpack.c.bf16 %v426, %v425
    %v443 = vpack.c.bf16 %v428, %v427
    %v444 = vpack.c.bf16 %v430, %v429
    %v445 = vpack.c.bf16 %v432, %v431
    %v446 = vpack.c.bf16 %v434, %v433
    %v447 = vpack.c.bf16 %v436, %v435
    %v448 = vpack.c.bf16 %v438, %v437
    %450 = vset.pattern.permute.xlu0 0
    %451 = vperm.xlu0 %450, %v440
    %v452 = vpop.permute.xlu0 %451
    %v454 = vlaneseq
    %v455 = vshrl.u32 %v454, 7
    %v456 = vsub.s32 0, %v455
    %v457 = vrot.slane %v452, %v456
    %458 = vmatprep.subr.bf16.mxu0 0
    %459 = vmatpush1.bf16.xpose.msra.mxu0 %v448
    %460 = vmatprep.subr.bf16.mxu0 0
    %461 = vmatpush1.bf16.xpose.msra.mxu0 %v447
    %462 = vmatprep.subr.bf16.mxu0 0
    %463 = vmatpush1.bf16.xpose.msra.mxu0 %v446
    %464 = vmatprep.subr.bf16.mxu0 0
    %465 = vmatpush1.bf16.xpose.msra.mxu0 %v445
    %466 = vmatprep.subr.bf16.mxu0 0
    %467 = vmatpush1.bf16.xpose.msra.mxu0 %v444
    %468 = vmatprep.subr.bf16.mxu0 0
    %469 = vmatpush1.bf16.xpose.msra.mxu0 %v443
    %470 = vmatprep.subr.bf16.mxu0 0
    %471 = vmatpush1.bf16.xpose.msra.mxu0 %v442
    %472 = vmatprep.subr.bf16.mxu0 0
    %473 = vmatpush1.bf16.xpose.msra.mxu0 %v441
    %474 = vmatprep.subr.bf16.mxu0 0
    %475 = vmatpush2.bf16.xpose.msra.mxu0 0
    %476 = vmatprep.subr.bf16.mxu0 0
    %477 = vmatpush2.bf16.xpose.msra.mxu0 0
    %478 = vmatprep.subr.bf16.mxu0 0
    %479 = vmatpush2.bf16.xpose.msra.mxu0 0
    %480 = vmatprep.subr.bf16.mxu0 0
    %481 = vmatpush2.bf16.xpose.msra.mxu0 0
    %482 = vmatprep.subr.bf16.mxu0 0
    %483 = vmatpush2.bf16.xpose.msra.mxu0 0
    %484 = vmatprep.subr.bf16.mxu0 0
    %485 = vmatpush2.bf16.xpose.msra.mxu0 0
    %486 = vmatprep.subr.bf16.mxu0 0
    %487 = vmatpush2.bf16.xpose.msra.mxu0 0
    %488 = vmatprep.subr.bf16.mxu0 0
    %489 = vmatpush2.bf16.xpose.msra.mxu0 0
    %490 = vmatprep.mubr.bf16.mxu0 0
    %491 = vmatmul.mubr.bf16.gmra.mxu0 %v439
    %v492 = vpop.f32.mrf.mxu0
    %v493 = vadd.f32 %v457, %v492
    %v494 = vpop.f32.mrf.mxu0
    %v495 = vpop.f32.mrf.mxu0
    %v496 = vpop.f32.mrf.mxu0
    %497 = vdwg.mxu0
    %498 = vst [vmem:[#allocation3] sm:$0x1] %v493
    // Predicated region
    $region30: #{tpu_custom_call.1} parent=1 // pred_check
      _
    $region31: #{tpu_custom_call.1} parent=1 // pred_check_branch
      %500 = sbr.rel (0) target = $region33
    $region32: #{tpu_custom_call.1} parent=1 // pred_region
      %s502 = ssub.s32 16, 16
      %503 = vsyncadd [#allocation4], %s502
      %s505 = sshll.u32 [#allocation3], 4
      %s506 = int_to_ptr.vmem [resolvable:$true] %s505
      %508 = dma.vmem_to_hbm [thread:$0]  %s506, 16, %s7, [#allocation4]
    $region33: #{tpu_custom_call.1} parent=1 // pred_fallthru
      _
    // Predicated region
    $region34: #{tpu_custom_call.1} parent=1 // pred_check
      _
    $region35: #{tpu_custom_call.1} parent=1 // pred_check_branch
      %510 = sbr.rel (0) target = $region37
    $region36: #{tpu_custom_call.1} parent=1 // pred_region
      %511 = dma.done [#allocation4], 16
    $region37: #{tpu_custom_call.1} parent=1 // pred_fallthru
      _
    %512 = vsyncpa [#allocation4], 1

</llo_original>
